<compile_context>
chip_gen: v6e
topology: v6e:2x2x1
jax: 0.10.0
libtpu: 0.0.40
codegen_flags: <defaults>
</compile_context>

<pallas_src>
import math
from functools import partial

import jax
import jax.numpy as jnp
from jax.experimental import pallas as pl
from jax.experimental.pallas import tpu as pltpu


def _round_up(x, m):
    return ((x + m - 1) // m) * m


def widely_linear_kernel(xr_ref, xi_ref, wl_ref, wr_ref, b_ref, o_ref, acc_ref):
    """One (i, j, k) grid step:  acc += xr @ Wl + xi @ Wr  (f32 accumulate)."""
    k = pl.program_id(2)

    @pl.when(k == 0)
    def _init():
        acc_ref[...] = jnp.zeros_like(acc_ref)

    acc_ref[...] += jnp.dot(xr_ref[...], wl_ref[...],
                            preferred_element_type=jnp.float32)
    acc_ref[...] += jnp.dot(xi_ref[...], wr_ref[...],
                            preferred_element_type=jnp.float32)

    @pl.when(k == pl.num_programs(2) - 1)
    def _finalize():
        o_ref[...] = (acc_ref[...] + b_ref[...]).astype(o_ref.dtype)


@partial(jax.jit, static_argnames=("tm", "tn", "tk", "compute_dtype"))
def widely_linear(x, weight1, weight2, bias, *,
                  tm=256, tn=256, tk=512, compute_dtype=jnp.bfloat16):
    """x: complex64 [B, in], weight1/2: complex64 [out, in], bias: complex64 [out]."""
    B, K = x.shape
    out_f = weight1.shape[0]
    N = 2 * out_f  # output slab width: [real | imag]

    # TODO(synk): for inference, hoist this complex64 deinterleave + weight
    # combine/transpose out of the per-call path (store pre-combined planes).
    xr = jnp.real(x).astype(jnp.float32)
    xi = jnp.imag(x).astype(jnp.float32)
    w1r = jnp.real(weight1).astype(jnp.float32)
    w1i = jnp.imag(weight1).astype(jnp.float32)
    w2r = jnp.real(weight2).astype(jnp.float32)
    w2i = jnp.imag(weight2).astype(jnp.float32)

    # Combined + pre-transposed weights, [in, 2*out]:
    #   columns [0, out)      -> real part of z
    #   columns [out, 2*out)  -> imag part of z
    w_l = jnp.concatenate([(w1r + w2r).T, (w1i + w2i).T], axis=1)
    w_r = jnp.concatenate([(w2i - w1i).T, (w1r - w2r).T], axis=1)
    if bias is None:
        b_cat = jnp.zeros((N,), jnp.float32)
    else:
        b_cat = jnp.concatenate([jnp.real(bias).astype(jnp.float32),
                                 jnp.imag(bias).astype(jnp.float32)])

    # Tile sizes honoring the (8, 128) layout constraint; zero-pad so the grid
    # divides evenly (zero padding is exact for matmul / bias).
    tm = min(tm, _round_up(B, 8))
    tn = min(tn, _round_up(N, 128))
    tk = min(tk, _round_up(K, 128))
    Mp, Np, Kp = _round_up(B, tm), _round_up(N, tn), _round_up(K, tk)

    xr_p = jnp.pad(xr, ((0, Mp - B), (0, Kp - K))).astype(compute_dtype)
    xi_p = jnp.pad(xi, ((0, Mp - B), (0, Kp - K))).astype(compute_dtype)
    wl_p = jnp.pad(w_l, ((0, Kp - K), (0, Np - N))).astype(compute_dtype)
    wr_p = jnp.pad(w_r, ((0, Kp - K), (0, Np - N))).astype(compute_dtype)
    b_p = jnp.pad(b_cat, (0, Np - N)).reshape(1, Np).astype(jnp.float32)

    grid = (Mp // tm, Np // tn, Kp // tk)

    in_itemsize = jnp.dtype(compute_dtype).itemsize
    # double-buffered tiles + f32 accumulator (for vmem_limit_bytes)
    est_vmem = (2 * 2 * tm * tk * in_itemsize      # xr, xi input tiles
                + 2 * 2 * tk * tn * in_itemsize    # Wl, Wr input tiles
                + 2 * tn * 4                       # bias tile
                + 2 * tm * tn * 4                  # output tile
                + tm * tn * 4)                     # accumulator scratch
    vmem_limit = int(min(48 * 1024 * 1024, max(16 * 1024 * 1024, 2 * est_vmem)))

    cost = pl.CostEstimate(
        flops=4 * B * K * N,  # two real [B,K]x[K,2*out] matmuls
        transcendentals=0,
        bytes_accessed=(2 * B * K + 2 * K * N) * in_itemsize + (N + B * N) * 4,
    )

    z_cat = pl.pallas_call(
        widely_linear_kernel,
        out_shape=jax.ShapeDtypeStruct((Mp, Np), jnp.float32),
        grid_spec=pltpu.PrefetchScalarGridSpec(
            num_scalar_prefetch=0,
            grid=grid,
            in_specs=[
                pl.BlockSpec((tm, tk), lambda i, j, k: (i, k)),   # xr
                pl.BlockSpec((tm, tk), lambda i, j, k: (i, k)),   # xi
                pl.BlockSpec((tk, tn), lambda i, j, k: (k, j)),   # Wl
                pl.BlockSpec((tk, tn), lambda i, j, k: (k, j)),   # Wr
                pl.BlockSpec((1, tn), lambda i, j, k: (0, j)),    # bias
            ],
            out_specs=pl.BlockSpec((tm, tn), lambda i, j, k: (i, j)),
            scratch_shapes=[pltpu.VMEM((tm, tn), jnp.float32)],
        ),
        compiler_params=pltpu.CompilerParams(
            dimension_semantics=("parallel", "parallel", "arbitrary"),
            vmem_limit_bytes=vmem_limit,
        ),
        cost_estimate=cost,
    )(xr_p, xi_p, wl_p, wr_p, b_p)

    zr = z_cat[:B, :out_f]
    zi = z_cat[:B, out_f:N]
    return jax.lax.complex(zr, zi)


def init_params(key, in_features, out_features):
    """Deterministic init mirroring kaiming_uniform_(a=sqrt(5)) bounds: 1/sqrt(fan_in)."""
    bound = 1.0 / math.sqrt(in_features)
    ks = jax.random.split(key, 6)
    shape_w = (out_features, in_features)
    w1 = jax.lax.complex(
        jax.random.uniform(ks[0], shape_w, jnp.float32, -bound, bound),
        jax.random.uniform(ks[1], shape_w, jnp.float32, -bound, bound),
    )
    w2 = jax.lax.complex(
        jax.random.uniform(ks[2], shape_w, jnp.float32, -bound, bound),
        jax.random.uniform(ks[3], shape_w, jnp.float32, -bound, bound),
    )
    b = jax.lax.complex(
        jax.random.uniform(ks[4], (out_features,), jnp.float32, -bound, bound),
        jax.random.uniform(ks[5], (out_features,), jnp.float32, -bound, bound),
    )
    return w1, w2, b


if __name__ == "__main__":
    def make_inputs(key, B, in_f, out_f):
        k_x, k_p = jax.random.split(key)
        kxr, kxi = jax.random.split(k_x)
        x = jax.lax.complex(
            jax.random.normal(kxr, (B, in_f), jnp.float32),
            jax.random.normal(kxi, (B, in_f), jnp.float32),
        )
        w1, w2, b = init_params(k_p, in_f, out_f)
        return x, w1, w2, b

    # Small shape matching the module's mm(input, weight.t()) semantics.
    x, w1, w2, b = make_inputs(jax.random.PRNGKey(0), 8, 32, 16)
    z = jax.block_until_ready(widely_linear(x, w1, w2, b))
    z_ref = x @ w1.T + jnp.conj(x) @ w2.T + b
    assert z.shape == z_ref.shape
    # bf16 MXU operands with f32 accumulation -> slightly relaxed tolerance.
    assert jnp.allclose(z, z_ref, atol=1e-1, rtol=5e-2), "mismatch vs reference (small)"

    # Second shape that exercises zero-padding and a multi-step (M, N, K) grid.
    x2, w12, w22, b2 = make_inputs(jax.random.PRNGKey(1), 72, 320, 96)
    z2 = jax.block_until_ready(widely_linear(x2, w12, w22, b2, tm=32, tn=128, tk=128))
    z2_ref = x2 @ w12.T + jnp.conj(x2) @ w22.T + b2
    assert jnp.allclose(z2, z2_ref, atol=1e-1, rtol=5e-2), "mismatch vs reference (tiled)"

    print("KERNEL_OK")
</pallas_src>

<mosaic_0001>
module attributes {stable_mosaic.version = 11 : i64} {
  func.func @widely_linear_kernel(%arg0: i32, %arg1: i32, %arg2: i32, %arg3: memref<8x128xbf16, #tpu.memory_space<vmem>>, %arg4: memref<8x128xbf16, #tpu.memory_space<vmem>>, %arg5: memref<128x128xbf16, #tpu.memory_space<vmem>>, %arg6: memref<128x128xbf16, #tpu.memory_space<vmem>>, %arg7: memref<1x128xf32, #tpu.memory_space<vmem>>, %arg8: memref<8x128xf32, #tpu.memory_space<vmem>>, %arg9: memref<8x128xf32, #tpu.memory_space<vmem>>) attributes {dimension_semantics = [#tpu.dimension_semantics<parallel>, #tpu.dimension_semantics<parallel>, #tpu.dimension_semantics<arbitrary>], iteration_bounds = array<i64: 1, 1, 1>, scalar_prefetch = 0 : i64, scratch_operands = 1 : i64, tpu.core_type = #tpu.core_type<tc>, window_params = [{transform_indices = @transform_0, window_bounds = array<i64: 8, 128>}, {transform_indices = @transform_1, window_bounds = array<i64: 8, 128>}, {transform_indices = @transform_2, window_bounds = array<i64: 128, 128>}, {transform_indices = @transform_3, window_bounds = array<i64: 128, 128>}, {transform_indices = @transform_4, window_bounds = array<i64: 1, 128>}, {transform_indices = @transform_5, window_bounds = array<i64: 8, 128>}]} {
    %c0_i32 = arith.constant 0 : i32
    %0 = arith.cmpi eq, %arg2, %c0_i32 : i32
    %1 = arith.extui %0 : i1 to i32
    %c0_i32_0 = arith.constant 0 : i32
    %2 = arith.cmpi ne, %1, %c0_i32_0 : i32
    scf.if %2 {
      %cst_19 = arith.constant 0.000000e+00 : f32
      %18 = vector.broadcast %cst_19 : f32 to vector<8x128xf32>
      %c0_20 = arith.constant 0 : index
      %c0_21 = arith.constant 0 : index
      %19 = vector.load %arg9[%c0_20, %c0_21] : memref<8x128xf32, #tpu.memory_space<vmem>>, vector<8x128xf32>
      tpu.vector_store %arg9[%c0_20, %c0_21], %18 {strides = array<i32>} : memref<8x128xf32, #tpu.memory_space<vmem>>, vector<8x128xf32>,
    } else {
    }
    %c0 = arith.constant 0 : index
    %c0_1 = arith.constant 0 : index
    %3 = vector.load %arg9[%c0, %c0_1] : memref<8x128xf32, #tpu.memory_space<vmem>>, vector<8x128xf32>
    %c0_2 = arith.constant 0 : index
    %c0_3 = arith.constant 0 : index
    %4 = vector.load %arg3[%c0_2, %c0_3] : memref<8x128xbf16, #tpu.memory_space<vmem>>, vector<8x128xbf16>
    %c0_4 = arith.constant 0 : index
    %c0_5 = arith.constant 0 : index
    %5 = vector.load %arg5[%c0_4, %c0_5] : memref<128x128xbf16, #tpu.memory_space<vmem>>, vector<128x128xbf16>
    %cst = arith.constant dense<0.000000e+00> : vector<8x128xf32>
    %6 = tpu.matmul %4, %5, %cst {dimension_numbers = #tpu.dot_dimension_numbers<[1], [0], [0], [1], [0, 0, 1, 1], [], []>} : vector<8x128xbf16>, vector<128x128xbf16>, vector<8x128xf32> -> vector<8x128xf32>
    %7 = arith.addf %3, %6 : vector<8x128xf32>
    %c0_6 = arith.constant 0 : index
    %c0_7 = arith.constant 0 : index
    %8 = vector.load %arg9[%c0_6, %c0_7] : memref<8x128xf32, #tpu.memory_space<vmem>>, vector<8x128xf32>
    tpu.vector_store %arg9[%c0_6, %c0_7], %7 {strides = array<i32>} : memref<8x128xf32, #tpu.memory_space<vmem>>, vector<8x128xf32>,
    %c0_8 = arith.constant 0 : index
    %c0_9 = arith.constant 0 : index
    %9 = vector.load %arg9[%c0_8, %c0_9] : memref<8x128xf32, #tpu.memory_space<vmem>>, vector<8x128xf32>
    %c0_10 = arith.constant 0 : index
    %c0_11 = arith.constant 0 : index
    %10 = vector.load %arg4[%c0_10, %c0_11] : memref<8x128xbf16, #tpu.memory_space<vmem>>, vector<8x128xbf16>
    %c0_12 = arith.constant 0 : index
    %c0_13 = arith.constant 0 : index
    %11 = vector.load %arg6[%c0_12, %c0_13] : memref<128x128xbf16, #tpu.memory_space<vmem>>, vector<128x128xbf16>
    %cst_14 = arith.constant dense<0.000000e+00> : vector<8x128xf32>
    %12 = tpu.matmul %10, %11, %cst_14 {dimension_numbers = #tpu.dot_dimension_numbers<[1], [0], [0], [1], [0, 0, 1, 1], [], []>} : vector<8x128xbf16>, vector<128x128xbf16>, vector<8x128xf32> -> vector<8x128xf32>
    %13 = arith.addf %9, %12 : vector<8x128xf32>
    %c0_15 = arith.constant 0 : index
    %c0_16 = arith.constant 0 : index
    %14 = vector.load %arg9[%c0_15, %c0_16] : memref<8x128xf32, #tpu.memory_space<vmem>>, vector<8x128xf32>
    tpu.vector_store %arg9[%c0_15, %c0_16], %13 {strides = array<i32>} : memref<8x128xf32, #tpu.memory_space<vmem>>, vector<8x128xf32>,
    %c0_i32_17 = arith.constant 0 : i32
    %15 = arith.cmpi eq, %arg2, %c0_i32_17 : i32
    %16 = arith.extui %15 : i1 to i32
    %c0_i32_18 = arith.constant 0 : i32
    %17 = arith.cmpi ne, %16, %c0_i32_18 : i32
    scf.if %17 {
      %c0_19 = arith.constant 0 : index
      %c0_20 = arith.constant 0 : index
      %18 = vector.load %arg9[%c0_19, %c0_20] : memref<8x128xf32, #tpu.memory_space<vmem>>, vector<8x128xf32>
      %c0_21 = arith.constant 0 : index
      %c0_22 = arith.constant 0 : index
      %19 = vector.load %arg7[%c0_21, %c0_22] : memref<1x128xf32, #tpu.memory_space<vmem>>, vector<1x128xf32>
      %20 = vector.broadcast %19 : vector<1x128xf32> to vector<8x128xf32>
      %21 = arith.addf %18, %20 : vector<8x128xf32>
      %c0_23 = arith.constant 0 : index
      %c0_24 = arith.constant 0 : index
      %22 = vector.load %arg8[%c0_23, %c0_24] : memref<8x128xf32, #tpu.memory_space<vmem>>, vector<8x128xf32>
      tpu.vector_store %arg8[%c0_23, %c0_24], %21 {strides = array<i32>} : memref<8x128xf32, #tpu.memory_space<vmem>>, vector<8x128xf32>,
    } else {
    }
    return
  }
  func.func @transform_0(%arg0: i32, %arg1: i32, %arg2: i32) -> (i32, i32) {
    %c0_i32 = arith.constant 0 : i32
    return %arg0, %arg2 : i32, i32
  }
  func.func @transform_1(%arg0: i32, %arg1: i32, %arg2: i32) -> (i32, i32) {
    %c0_i32 = arith.constant 0 : i32
    return %arg0, %arg2 : i32, i32
  }
  func.func @transform_2(%arg0: i32, %arg1: i32, %arg2: i32) -> (i32, i32) {
    %c0_i32 = arith.constant 0 : i32
    return %arg2, %arg1 : i32, i32
  }
  func.func @transform_3(%arg0: i32, %arg1: i32, %arg2: i32) -> (i32, i32) {
    %c0_i32 = arith.constant 0 : i32
    return %arg2, %arg1 : i32, i32
  }
  func.func @transform_4(%arg0: i32, %arg1: i32, %arg2: i32) -> (i32, i32) {
    %c0_i32 = arith.constant 0 : i32
    %c0_i32_0 = arith.constant 0 : i32
    return %c0_i32, %arg1 : i32, i32
  }
  func.func @transform_5(%arg0: i32, %arg1: i32, %arg2: i32) -> (i32, i32) {
    %c0_i32 = arith.constant 0 : i32
    return %arg0, %arg1 : i32, i32
  }
}

</mosaic_0001>

<llo_original>
// kernel: custom-call.7
$region0: #{custom-call.7}
  %s0 = inlined_call_operand.hbm [shape: c64[16], index: 0, kind: input, shape index: {}]
  %s1 = inlined_call_operand.vmem [shape: f32[16], index: 1, kind: output, shape index: {}]
  %s2 = scalar_lea.hbm %s0, 16
  $region1: #{custom-call.7} parent=0
    #allocation0 [shape = 's32[1]{0}', space=sflag, size = 0x4, scoped, tag = 'scoped memory for custom-call.7']
    %3 = vsyncpa [#allocation0], 0
    %s4 = sshll.u32 %s1, 4
    %s5 = int_to_ptr.vmem [resolvable:$true] %s4
    %7 = dma.hbm_to_vmem [thread:$0]  %s2, 16, %s5, [#allocation0]
    %8 = dma.done [#allocation0], 16
    %9 = vsyncpa [#allocation0], 1

// kernel: custom-call.1
$region0: #{custom-call.1}
  %s0 = inlined_call_operand.hbm [shape: c64[8,32], index: 0, kind: input, shape index: {}]
  %s1 = inlined_call_operand.vmem [shape: f32[8,32], index: 1, kind: output, shape index: {}]
  %s2 = scalar_lea.hbm %s0, 128
  $region1: #{custom-call.1} parent=0
    #allocation0 [shape = 's32[1]{0}', space=sflag, size = 0x4, scoped, tag = 'scoped memory for custom-call.1']
    %3 = vsyncpa [#allocation0], 0
    %s4 = sshll.u32 %s1, 4
    %s5 = int_to_ptr.vmem [resolvable:$true] %s4
    %7 = dma.hbm_to_vmem [thread:$0]  %s2, 128, %s5, [#allocation0]
    %8 = dma.done [#allocation0], 128
    %9 = vsyncpa [#allocation0], 1

// kernel: custom-call.6
$region0: #{custom-call.6}
  %s0 = inlined_call_operand.hbm [shape: c64[16], index: 0, kind: input, shape index: {}]
  %s1 = inlined_call_operand.vmem [shape: f32[16], index: 1, kind: output, shape index: {}]
  $region1: #{custom-call.6} parent=0
    #allocation0 [shape = 's32[1]{0}', space=sflag, size = 0x4, scoped, tag = 'scoped memory for custom-call.6']
    %2 = vsyncpa [#allocation0], 0
    %s3 = sshll.u32 %s1, 4
    %s4 = int_to_ptr.vmem [resolvable:$true] %s3
    %6 = dma.hbm_to_vmem [thread:$0]  %s0, 16, %s4, [#allocation0]
    %7 = dma.done [#allocation0], 16
    %8 = vsyncpa [#allocation0], 1

// kernel: custom-call
$region0: #{custom-call}
  %s0 = inlined_call_operand.hbm [shape: c64[8,32], index: 0, kind: input, shape index: {}]
  %s1 = inlined_call_operand.vmem [shape: f32[8,32], index: 1, kind: output, shape index: {}]
  $region1: #{custom-call} parent=0
    #allocation0 [shape = 's32[1]{0}', space=sflag, size = 0x4, scoped, tag = 'scoped memory for custom-call']
    %2 = vsyncpa [#allocation0], 0
    %s3 = sshll.u32 %s1, 4
    %s4 = int_to_ptr.vmem [resolvable:$true] %s3
    %6 = dma.hbm_to_vmem [thread:$0]  %s0, 128, %s4, [#allocation0]
    %7 = dma.done [#allocation0], 128
    %8 = vsyncpa [#allocation0], 1

// kernel: custom-call.3
$region0: #{custom-call.3}
  %s0 = inlined_call_operand.vmem [shape: c64[16,32], index: 0, kind: input, shape index: {}]
  %s1 = inlined_call_operand.vmem [shape: f32[16,32], index: 1, kind: output, shape index: {}]
  %s2 = scalar_lea.vmem %s0, 32
  %v3 = vld [vmem:[%s2] sm:$0xff]
  %4 = vst [vmem:[%s1] sm:$0xff] %v3
  %s5 = scalar_lea.vmem %s1, 8
  %s6 = scalar_lea.vmem %s2, 8
  %v7 = vld [vmem:[%s6] sm:$0xff]
  %8 = vst [vmem:[%s5] sm:$0xff] %v7
  %s9 = scalar_lea.vmem %s1, 16
  %s10 = scalar_lea.vmem %s2, 16
  %v11 = vld [vmem:[%s10] sm:$0xff]
  %12 = vst [vmem:[%s9] sm:$0xff] %v11
  %s13 = scalar_lea.vmem %s1, 24
  %s14 = scalar_lea.vmem %s2, 24
  %v15 = vld [vmem:[%s14] sm:$0xff]
  %16 = vst [vmem:[%s13] sm:$0xff] %v15

// kernel: custom-call.2
$region0: #{custom-call.2}
  %s0 = inlined_call_operand.vmem [shape: c64[16,32], index: 0, kind: input, shape index: {}]
  %s1 = inlined_call_operand.vmem [shape: f32[16,32], index: 1, kind: output, shape index: {}]
  %v2 = vld [vmem:[%s0] sm:$0xff]
  %3 = vst [vmem:[%s1] sm:$0xff] %v2
  %s4 = scalar_lea.vmem %s1, 8
  %s5 = scalar_lea.vmem %s0, 8
  %v6 = vld [vmem:[%s5] sm:$0xff]
  %7 = vst [vmem:[%s4] sm:$0xff] %v6
  %s8 = scalar_lea.vmem %s1, 16
  %s9 = scalar_lea.vmem %s0, 16
  %v10 = vld [vmem:[%s9] sm:$0xff]
  %11 = vst [vmem:[%s8] sm:$0xff] %v10
  %s12 = scalar_lea.vmem %s1, 24
  %s13 = scalar_lea.vmem %s0, 24
  %v14 = vld [vmem:[%s13] sm:$0xff]
  %15 = vst [vmem:[%s12] sm:$0xff] %v14

// kernel: custom-call.8
$region0: #{custom-call.8}
  %s0 = inlined_call_operand.vmem [shape: f32[8,16], index: 0, kind: input, shape index: {}]
  %s1 = inlined_call_operand.vmem [shape: f32[8,16], index: 1, kind: input, shape index: {}]
  %s2 = inlined_call_operand.hbm [shape: c64[8,16], index: 2, kind: output, shape index: {}]
  %s3 = scalar_lea.hbm %s2, 128
  $region1: #{custom-call.8} parent=0
    #allocation0 [shape = 's32[1]{0}', space=sflag, size = 0x4, scoped, tag = 'scoped memory for custom-call.8']
    %4 = vsyncpa [#allocation0], 0
    %s5 = sshll.u32 %s0, 4
    %s6 = int_to_ptr.vmem [resolvable:$true] %s5
    %8 = dma.vmem_to_hbm [thread:$0]  %s6, 128, %s2, [#allocation0]
    %9 = dma.done [#allocation0], 128
    %10 = vsyncpa [#allocation0], 1
  $region2: #{custom-call.8} parent=0
    #allocation1 [shape = 's32[1]{0}', space=sflag, size = 0x4, scoped, tag = 'scoped memory for custom-call.8']
    %11 = vsyncpa [#allocation1], 0
    %s12 = sshll.u32 %s1, 4
    %s13 = int_to_ptr.vmem [resolvable:$true] %s12
    %15 = dma.vmem_to_hbm [thread:$0]  %s13, 128, %s3, [#allocation1]
    %16 = dma.done [#allocation1], 128
    %17 = vsyncpa [#allocation1], 1

// kernel: widely_linear.1
$region0: #{widely_linear.1}
  #allocation0 [shape = 'u32[]', space=smem, size = 0x4, offset = 0x4, fixed_abs, tag = 'smem constant byte address 0x4 - core index']
  #allocation1 [shape = 'u32[144,128]{1,0:T(1,128)}', space=vmem, size = 0x12000, scoped, tag = 'internal scratch']
  #allocation2 [shape = 'f32[8,128]{1,0:T(8,128)}', space=vmem, size = 0x1000, scoped, tag = 'scratch operand']
  %s0 = inlined_call_operand.vmem [shape: bf16[8,128], index: 0, kind: input, shape index: {}]
  %s1 = inlined_call_operand.vmem [shape: bf16[8,128], index: 1, kind: input, shape index: {}]
  %s2 = inlined_call_operand.vmem [shape: bf16[128,128], index: 2, kind: input, shape index: {}]
  %s3 = inlined_call_operand.vmem [shape: bf16[128,128], index: 3, kind: input, shape index: {}]
  %s4 = inlined_call_operand.vmem [shape: f32[1,128], index: 4, kind: input, shape index: {}]
  %s5 = inlined_call_operand.vmem [shape: f32[8,128], index: 5, kind: output, shape index: {}]
  %s6 = sld [smem:[#allocation0]]
  $region38: #{widely_linear.1} parent=0
    _
  %s8 = ssub.s32 1, %s6
  %s9 = scalar_select 0, %s8, %s6
  // Predicated region
  $region2: #{widely_linear.1} parent=0 // pred_check
    _
  $region3: #{widely_linear.1} parent=0 // pred_check_branch
    %11 = sbr.rel (0) target = $region5
  $region4: #{widely_linear.1} parent=0 // pred_region
    _
  $region5: #{widely_linear.1} parent=0 // pred_fallthru
    _
  // Predicated region
  $region6: #{widely_linear.1} parent=0 // pred_check
    _
  $region7: #{widely_linear.1} parent=0 // pred_check_branch
    %13 = sbr.rel (0) target = $region9
  $region8: #{widely_linear.1} parent=0 // pred_region
    _
  $region9: #{widely_linear.1} parent=0 // pred_fallthru
    _
  // Predicated region
  $region10: #{widely_linear.1} parent=0 // pred_check
    _
  $region11: #{widely_linear.1} parent=0 // pred_check_branch
    %15 = sbr.rel (0) target = $region13
  $region12: #{widely_linear.1} parent=0 // pred_region
    _
  $region13: #{widely_linear.1} parent=0 // pred_fallthru
    _
  // Predicated region
  $region14: #{widely_linear.1} parent=0 // pred_check
    _
  $region15: #{widely_linear.1} parent=0 // pred_check_branch
    %17 = sbr.rel (0) target = $region17
  $region16: #{widely_linear.1} parent=0 // pred_region
    _
  $region17: #{widely_linear.1} parent=0 // pred_fallthru
    _
  // Predicated region
  $region18: #{widely_linear.1} parent=0 // pred_check
    _
  $region19: #{widely_linear.1} parent=0 // pred_check_branch
    %19 = sbr.rel (0) target = $region21
  $region20: #{widely_linear.1} parent=0 // pred_region
    _
  $region21: #{widely_linear.1} parent=0 // pred_fallthru
    _
  %p21 = scmp.eq.s32.totalorder 0, 0
  // Predicated region
  $region22: #{widely_linear.1} parent=0 // pred_check
    %p22 = pneg %p21
  $region23: #{widely_linear.1} parent=0 // pred_check_branch
    %24 = sbr.rel (%p22) target = $region25
  $region24: #{widely_linear.1} parent=0 // pred_region
    %25 = vst [vmem:[#allocation2] sm:$0xff] 0.0
  $region25: #{widely_linear.1} parent=0 // pred_fallthru
    _
  %v26 = vld [vmem:[#allocation2] sm:$0xff]
  %v27 = vld [vmem:[%s0] sm:$0xf]
  %v28 = vld [vmem:[%s2] sm:$0xf]
  %v29 = vld [vmem:[%s2 + $0x4] sm:$0xf]
  %v30 = vld [vmem:[%s2 + $0x8] sm:$0xf]
  %v31 = vld [vmem:[%s2 + $0xc] sm:$0xf]
  %v32 = vld [vmem:[%s2 + $0x10] sm:$0xf]
  %v33 = vld [vmem:[%s2 + $0x14] sm:$0xf]
  %v34 = vld [vmem:[%s2 + $0x18] sm:$0xf]
  %v35 = vld [vmem:[%s2 + $0x1c] sm:$0xf]
  %v36 = vld [vmem:[%s2 + $0x20] sm:$0xf]
  %v37 = vld [vmem:[%s2 + $0x24] sm:$0xf]
  %v38 = vld [vmem:[%s2 + $0x28] sm:$0xf]
  %v39 = vld [vmem:[%s2 + $0x2c] sm:$0xf]
  %v40 = vld [vmem:[%s2 + $0x30] sm:$0xf]
  %v41 = vld [vmem:[%s2 + $0x34] sm:$0xf]
  %v42 = vld [vmem:[%s2 + $0x38] sm:$0xf]
  %v43 = vld [vmem:[%s2 + $0x3c] sm:$0xf]
  %v60 = vunpack.c.l.b16 %v28
  %v61 = vunpack.c.l.b16 %v29
  %v62 = vunpack.c.l.b16 %v30
  %v63 = vunpack.c.l.b16 %v31
  %v64 = vunpack.c.l.b16 %v32
  %v65 = vunpack.c.l.b16 %v33
  %v66 = vunpack.c.l.b16 %v34
  %v67 = vunpack.c.l.b16 %v35
  %v68 = vunpack.c.l.b16 %v36
  %v69 = vunpack.c.l.b16 %v37
  %v70 = vunpack.c.l.b16 %v38
  %v71 = vunpack.c.l.b16 %v39
  %v72 = vunpack.c.l.b16 %v40
  %v73 = vunpack.c.l.b16 %v41
  %v74 = vunpack.c.l.b16 %v42
  %v75 = vunpack.c.l.b16 %v43
  %v76 = vpack.c.b16 %v61, %v60
  %v77 = vpack.c.b16 %v63, %v62
  %v78 = vpack.c.b16 %v65, %v64
  %v79 = vpack.c.b16 %v67, %v66
  %v80 = vpack.c.b16 %v69, %v68
  %v81 = vpack.c.b16 %v71, %v70
  %v82 = vpack.c.b16 %v73, %v72
  %v83 = vpack.c.b16 %v75, %v74
  %92 = vmatprep.subr.bf16.mxu0 0
  %93 = vmatpush1.bf16.msra.mxu0 %v83
  %94 = vmatprep.subr.bf16.mxu0 0
  %95 = vmatpush1.bf16.msra.mxu0 %v82
  %96 = vmatprep.subr.bf16.mxu0 0
  %97 = vmatpush1.bf16.msra.mxu0 %v81
  %98 = vmatprep.subr.bf16.mxu0 0
  %99 = vmatpush1.bf16.msra.mxu0 %v80
  %100 = vmatprep.subr.bf16.mxu0 0
  %101 = vmatpush1.bf16.msra.mxu0 %v79
  %102 = vmatprep.subr.bf16.mxu0 0
  %103 = vmatpush1.bf16.msra.mxu0 %v78
  %104 = vmatprep.subr.bf16.mxu0 0
  %105 = vmatpush1.bf16.msra.mxu0 %v77
  %106 = vmatprep.subr.bf16.mxu0 0
  %107 = vmatpush1.bf16.msra.mxu0 %v76
  %108 = vmatprep.subr.bf16.mxu0 0
  %109 = vmatpush2.bf16.msra.mxu0 0
  %110 = vmatprep.subr.bf16.mxu0 0
  %111 = vmatpush2.bf16.msra.mxu0 0
  %112 = vmatprep.subr.bf16.mxu0 0
  %113 = vmatpush2.bf16.msra.mxu0 0
  %114 = vmatprep.subr.bf16.mxu0 0
  %115 = vmatpush2.bf16.msra.mxu0 0
  %116 = vmatprep.subr.bf16.mxu0 0
  %117 = vmatpush2.bf16.msra.mxu0 0
  %118 = vmatprep.subr.bf16.mxu0 0
  %119 = vmatpush2.bf16.msra.mxu0 0
  %120 = vmatprep.subr.bf16.mxu0 0
  %121 = vmatpush2.bf16.msra.mxu0 0
  %122 = vmatprep.subr.bf16.mxu0 0
  %123 = vmatpush2.bf16.msra.mxu0 0
  %124 = vmatprep.mubr.bf16.mxu0 0
  %125 = vmatmul.mubr.bf16.gmra.mxu0 %v27
  %v126 = vpop.f32.mrf.mxu0
  %v127 = vadd.f32 0.0, %v126
  %v128 = vpop.f32.mrf.mxu0
  %v129 = vpop.f32.mrf.mxu0
  %v130 = vpop.f32.mrf.mxu0
  %131 = vdwg.mxu0
  %v132 = vadd.f32 %v26, %v127
  %133 = vst [vmem:[#allocation2] sm:$0xff] %v132
  %v134 = vld [vmem:[#allocation2] sm:$0xff]
  %v135 = vld [vmem:[%s1] sm:$0xf]
  %v136 = vld [vmem:[%s3] sm:$0xf]
  %v137 = vld [vmem:[%s3 + $0x4] sm:$0xf]
  %v138 = vld [vmem:[%s3 + $0x8] sm:$0xf]
  %v139 = vld [vmem:[%s3 + $0xc] sm:$0xf]
  %v140 = vld [vmem:[%s3 + $0x10] sm:$0xf]
  %v141 = vld [vmem:[%s3 + $0x14] sm:$0xf]
  %v142 = vld [vmem:[%s3 + $0x18] sm:$0xf]
  %v143 = vld [vmem:[%s3 + $0x1c] sm:$0xf]
  %v144 = vld [vmem:[%s3 + $0x20] sm:$0xf]
  %v145 = vld [vmem:[%s3 + $0x24] sm:$0xf]
  %v146 = vld [vmem:[%s3 + $0x28] sm:$0xf]
  %v147 = vld [vmem:[%s3 + $0x2c] sm:$0xf]
  %v148 = vld [vmem:[%s3 + $0x30] sm:$0xf]
  %v149 = vld [vmem:[%s3 + $0x34] sm:$0xf]
  %v150 = vld [vmem:[%s3 + $0x38] sm:$0xf]
  %v151 = vld [vmem:[%s3 + $0x3c] sm:$0xf]
  %v168 = vunpack.c.l.b16 %v136
  %v169 = vunpack.c.l.b16 %v137
  %v170 = vunpack.c.l.b16 %v138
  %v171 = vunpack.c.l.b16 %v139
  %v172 = vunpack.c.l.b16 %v140
  %v173 = vunpack.c.l.b16 %v141
  %v174 = vunpack.c.l.b16 %v142
  %v175 = vunpack.c.l.b16 %v143
  %v176 = vunpack.c.l.b16 %v144
  %v177 = vunpack.c.l.b16 %v145
  %v178 = vunpack.c.l.b16 %v146
  %v179 = vunpack.c.l.b16 %v147
  %v180 = vunpack.c.l.b16 %v148
  %v181 = vunpack.c.l.b16 %v149
  %v182 = vunpack.c.l.b16 %v150
  %v183 = vunpack.c.l.b16 %v151
  %v184 = vpack.c.b16 %v169, %v168
  %v185 = vpack.c.b16 %v171, %v170
  %v186 = vpack.c.b16 %v173, %v172
  %v187 = vpack.c.b16 %v175, %v174
  %v188 = vpack.c.b16 %v177, %v176
  %v189 = vpack.c.b16 %v179, %v178
  %v190 = vpack.c.b16 %v181, %v180
  %v191 = vpack.c.b16 %v183, %v182
  %200 = vmatprep.subr.bf16.mxu0 0
  %201 = vmatpush1.bf16.msra.mxu0 %v191
  %202 = vmatprep.subr.bf16.mxu0 0
  %203 = vmatpush1.bf16.msra.mxu0 %v190
  %204 = vmatprep.subr.bf16.mxu0 0
  %205 = vmatpush1.bf16.msra.mxu0 %v189
  %206 = vmatprep.subr.bf16.mxu0 0
  %207 = vmatpush1.bf16.msra.mxu0 %v188
  %208 = vmatprep.subr.bf16.mxu0 0
  %209 = vmatpush1.bf16.msra.mxu0 %v187
  %210 = vmatprep.subr.bf16.mxu0 0
  %211 = vmatpush1.bf16.msra.mxu0 %v186
  %212 = vmatprep.subr.bf16.mxu0 0
  %213 = vmatpush1.bf16.msra.mxu0 %v185
  %214 = vmatprep.subr.bf16.mxu0 0
  %215 = vmatpush1.bf16.msra.mxu0 %v184
  %216 = vmatprep.subr.bf16.mxu0 0
  %217 = vmatpush2.bf16.msra.mxu0 0
  %218 = vmatprep.subr.bf16.mxu0 0
  %219 = vmatpush2.bf16.msra.mxu0 0
  %220 = vmatprep.subr.bf16.mxu0 0
  %221 = vmatpush2.bf16.msra.mxu0 0
  %222 = vmatprep.subr.bf16.mxu0 0
  %223 = vmatpush2.bf16.msra.mxu0 0
  %224 = vmatprep.subr.bf16.mxu0 0
  %225 = vmatpush2.bf16.msra.mxu0 0
  %226 = vmatprep.subr.bf16.mxu0 0
  %227 = vmatpush2.bf16.msra.mxu0 0
  %228 = vmatprep.subr.bf16.mxu0 0
  %229 = vmatpush2.bf16.msra.mxu0 0
  %230 = vmatprep.subr.bf16.mxu0 0
  %231 = vmatpush2.bf16.msra.mxu0 0
  %232 = vmatprep.mubr.bf16.mxu0 0
  %233 = vmatmul.mubr.bf16.gmra.mxu0 %v135
  %v234 = vpop.f32.mrf.mxu0
  %v235 = vadd.f32 0.0, %v234
  %v236 = vpop.f32.mrf.mxu0
  %v237 = vpop.f32.mrf.mxu0
  %v238 = vpop.f32.mrf.mxu0
  %239 = vdwg.mxu0
  %v240 = vadd.f32 %v134, %v235
  %241 = vst [vmem:[#allocation2] sm:$0xff] %v240
  // Predicated region
  $region26: #{widely_linear.1} parent=0 // pred_check
    %p242 = pneg %p21
  $region27: #{widely_linear.1} parent=0 // pred_check_branch
    %244 = sbr.rel (%p242) target = $region29
  $region28: #{widely_linear.1} parent=0 // pred_region
    %v245 = vld [vmem:[#allocation2] sm:$0xff]
    %v246 = vld [vmem:[%s4] sm:$0x1]
    %v248 = vlaneseq
    %v249 = vshrl.u32 %v248, 7
    %v250 = vsub.s32 0, %v249
    %v251 = vrot.slane %v246, %v250
    %v253 = vadd.f32 %v245, %v251
    %254 = vst [vmem:[%s5] sm:$0xff] %v253
  $region29: #{widely_linear.1} parent=0 // pred_fallthru
    _
  // Predicated region
  $region30: #{widely_linear.1} parent=0 // pred_check
    _
  $region31: #{widely_linear.1} parent=0 // pred_check_branch
    %256 = sbr.rel (0) target = $region33
  $region32: #{widely_linear.1} parent=0 // pred_region
    _
  $region33: #{widely_linear.1} parent=0 // pred_fallthru
    _
  // Predicated region
  $region34: #{widely_linear.1} parent=0 // pred_check
    _
  $region35: #{widely_linear.1} parent=0 // pred_check_branch
    %258 = sbr.rel (0) target = $region37
  $region36: #{widely_linear.1} parent=0 // pred_region
    _
  $region37: #{widely_linear.1} parent=0 // pred_fallthru
    _

</llo_original>
